<compile_context>
chip_gen: v7x
topology: tpu7x:2x2x1
jax: 0.10.0
libtpu: 0.0.40
codegen_flags: <defaults>
</compile_context>

<pallas_src>
import functools

import jax
import jax.numpy as jnp
from jax import lax
from jax.experimental import pallas as pl
from jax.experimental.pallas import tpu as pltpu


def _round_up(x, m):
    return (x + m - 1) // m * m


def _ring_loss_kernel(emb_ref, r_ref, out_ref, acc_ref, *,
                      lamda, l2_norm, n_total, tile_n, tiles_per_split):
    s = pl.program_id(0)   # TensorCore split (parallel axis)
    i = pl.program_id(1)   # row-tile within the split (reduction axis)

    @pl.when(i == 0)
    def _init():
        acc_ref[...] = jnp.zeros_like(acc_ref)

    x = emb_ref[...].astype(jnp.float32)                       # (tile_n, D)

    if l2_norm:
        # F.normalize(v, 2, dim=-1) = v / max(||v||_2, 1e-12).
        # 1/max(sqrt(s2), 1e-12) == min(rsqrt(s2), 1e12); rsqrt rides the EUP slot.
        s2 = jnp.sum(x * x, axis=-1, keepdims=True)            # (tile_n, 1)
        inv = jnp.minimum(lax.rsqrt(s2), jnp.float32(1e12))
        x = x * inv

    d = x - r_ref[0]                                           # broadcast (embedding - R)
    sq = d * d                                                 # (tile_n, D)

    # Mask rows past N (tail-tile padding and clamped out-of-range tiles contribute 0).
    logical_tile = s * tiles_per_split + i
    row = logical_tile * tile_n + lax.broadcasted_iota(jnp.int32, (tile_n, 1), 0)
    sq = jnp.where(row < n_total, sq, 0.0)

    # Per step: only a row (sublane) reduce into the lane-wide accumulator.
    acc_ref[...] += jnp.sum(sq, axis=0, keepdims=True)         # (1, D)

    @pl.when(i == pl.num_programs(1) - 1)
    def _finalize():
        total = jnp.sum(acc_ref[...])                          # one cross-lane reduce per split
        out_ref[...] = (total * jnp.float32(lamda * 0.5 / n_total)).reshape(1, 1, 1)


def ring_loss(embedding, R, *, lamda, l2_norm=True, tile_n=None, num_splits=2,
              target_tile_bytes=4 * 1024 * 1024, vmem_limit_bytes=32 * 1024 * 1024):
    """embedding: (N, D) float (f32 or bf16); R: (1,) float ring radius. Returns scalar loss."""
    N, D = embedding.shape
    itemsize = jnp.dtype(embedding.dtype).itemsize
    d_padded = _round_up(D, 128)                 # lane-padded footprint of one row
    sublane = 8 * max(1, 4 // itemsize)          # 8 rows (f32), 16 (bf16), 32 (int8)

    if tile_n is None:
        # Size against the f32-equivalent, lane-padded footprint so the in-kernel f32
        # intermediates also fit comfortably under the (double-buffered) VMEM budget.
        rows = max(sublane, target_tile_bytes // (d_padded * 4))
        rows = (rows // sublane) * sublane
        rows = min(rows, _round_up(pl.cdiv(N, num_splits), sublane))
        tile_n = int(rows)

    total_tiles = pl.cdiv(N, tile_n)
    tiles_per_split = pl.cdiv(total_tiles, num_splits)

    kernel = functools.partial(
        _ring_loss_kernel,
        lamda=float(lamda), l2_norm=bool(l2_norm), n_total=int(N),
        tile_n=int(tile_n), tiles_per_split=int(tiles_per_split))

    def emb_index_map(s, i):
        # Clamp so splits that over-cover the row range just re-read the last block;
        # the in-kernel row mask zeroes their contribution.
        return (jnp.minimum(s * tiles_per_split + i, total_tiles - 1), 0)

    partials = pl.pallas_call(
        kernel,
        out_shape=jax.ShapeDtypeStruct((num_splits, 1, 1), jnp.float32),
        grid_spec=pltpu.PrefetchScalarGridSpec(
            num_scalar_prefetch=0,
            grid=(num_splits, tiles_per_split),
            in_specs=[
                pl.BlockSpec((tile_n, D), emb_index_map),        # streamed row tile
                pl.BlockSpec(memory_space=pltpu.SMEM),           # scalar R parameter
            ],
            out_specs=pl.BlockSpec((1, 1, 1), lambda s, i: (s, 0, 0)),  # per-split partial
            scratch_shapes=[pltpu.VMEM((1, D), jnp.float32)],    # lane-wide accumulator
        ),
        compiler_params=pltpu.CompilerParams(
            dimension_semantics=("parallel", "arbitrary"),
            vmem_limit_bytes=int(vmem_limit_bytes),
        ),
    )(embedding, R)

    return jnp.sum(partials)


if __name__ == "__main__":
    key = jax.random.PRNGKey(0)
    k_emb, k_r = jax.random.split(key)

    lamda = 0.1
    D = 32
    # Deterministic stand-in for torch.rand(1) init of the ring radius R.
    R = jax.random.uniform(k_r, (1,), dtype=jnp.float32)

    def reference(emb, r):
        x = emb / jnp.maximum(jnp.linalg.norm(emb, axis=-1, keepdims=True), 1e-12)
        return jnp.mean(jnp.sum((x - r[0]) ** 2, axis=1)) * lamda * 0.5

    # N=16 exercises the clean even-split path; N=13 exercises the tail-row masking.
    for n in (16, 13):
        emb = jax.random.normal(jax.random.fold_in(k_emb, n), (n, D), dtype=jnp.float32)
        loss = jax.block_until_ready(ring_loss(emb, R, lamda=lamda, l2_norm=True))
        ref = reference(emb, R)
        assert jnp.allclose(loss, ref, rtol=1e-5, atol=1e-6), (n, loss, ref)

    print("KERNEL_OK")
</pallas_src>

<mosaic_0001>
module attributes {stable_mosaic.version = 11 : i64} {
  func.func @_ring_loss_kernel(%arg0: i32, %arg1: i32, %arg2: memref<8x32xf32, #tpu.memory_space<vmem>>, %arg3: memref<1xf32, #tpu.memory_space<smem>>, %arg4: memref<1x1x1xf32, #tpu.memory_space<vmem>>, %arg5: memref<1x32xf32, #tpu.memory_space<vmem>>) attributes {dimension_semantics = [#tpu.dimension_semantics<parallel>, #tpu.dimension_semantics<arbitrary>], iteration_bounds = array<i64: 2, 1>, scalar_prefetch = 0 : i64, scratch_operands = 1 : i64, tpu.core_type = #tpu.core_type<tc>, window_params = [{transform_indices = @transform_0, window_bounds = array<i64: 8, 32>}, {transform_indices = @transform_1, window_bounds = array<i64: 1>}, {transform_indices = @transform_2, window_bounds = array<i64: 1, 1, 1>}]} {
    %c0_i32 = arith.constant 0 : i32
    %0 = arith.cmpi eq, %arg1, %c0_i32 : i32
    %1 = arith.extui %0 : i1 to i32
    %c0_i32_0 = arith.constant 0 : i32
    %2 = arith.cmpi ne, %1, %c0_i32_0 : i32
    scf.if %2 {
      %cst_12 = arith.constant 0.000000e+00 : f32
      %36 = vector.broadcast %cst_12 : f32 to vector<1x32xf32>
      %c0_13 = arith.constant 0 : index
      %c0_14 = arith.constant 0 : index
      %37 = vector.load %arg5[%c0_13, %c0_14] : memref<1x32xf32, #tpu.memory_space<vmem>>, vector<1x32xf32>
      tpu.vector_store %arg5[%c0_13, %c0_14], %36 {strides = array<i32>} : memref<1x32xf32, #tpu.memory_space<vmem>>, vector<1x32xf32>,
    } else {
    }
    %c0 = arith.constant 0 : index
    %c0_1 = arith.constant 0 : index
    %3 = vector.load %arg2[%c0, %c0_1] : memref<8x32xf32, #tpu.memory_space<vmem>>, vector<8x32xf32>
    %4 = arith.mulf %3, %3 : vector<8x32xf32>
    %cst = arith.constant dense<0.000000e+00> : vector<8xf32>
    %5 = vector.multi_reduction <add>, %4, %cst [1] : vector<8x32xf32> to vector<8xf32>
    %6 = vector.shape_cast %5 : vector<8xf32> to vector<8x1xf32>
    %7 = math.rsqrt %6 : vector<8x1xf32>
    %cst_2 = arith.constant 9.99999995E+11 : f32
    %8 = vector.broadcast %cst_2 : f32 to vector<8x1xf32>
    %9 = arith.minimumf %7, %8 : vector<8x1xf32>
    %10 = vector.broadcast %9 : vector<8x1xf32> to vector<8x32xf32>
    %11 = arith.mulf %3, %10 : vector<8x32xf32>
    %c0_3 = arith.constant 0 : index
    %12 = memref.load %arg3[%c0_3] : memref<1xf32, #tpu.memory_space<smem>>
    %13 = vector.broadcast %12 : f32 to vector<8x32xf32>
    %14 = arith.subf %11, %13 : vector<8x32xf32>
    %15 = arith.mulf %14, %14 : vector<8x32xf32>
    %c1_i32 = arith.constant 1 : i32
    %16 = arith.muli %arg0, %c1_i32 : i32
    %17 = arith.addi %16, %arg1 : i32
    %c8_i32 = arith.constant 8 : i32
    %18 = arith.muli %17, %c8_i32 : i32
    %19 = tpu.iota {dimensions = array<i32: 0>} : vector<8x1xi32>
    %20 = vector.broadcast %18 : i32 to vector<8x1xi32>
    %21 = arith.addi %20, %19 : vector<8x1xi32>
    %c16_i32 = arith.constant 16 : i32
    %22 = vector.broadcast %c16_i32 : i32 to vector<8x1xi32>
    %23 = arith.cmpi slt, %21, %22 : vector<8x1xi32>
    %cst_4 = arith.constant 0.000000e+00 : f32
    %24 = vector.shape_cast %23 : vector<8x1xi1> to vector<8x1xi1>
    %25 = vector.broadcast %24 : vector<8x1xi1> to vector<8x32xi1>
    %26 = vector.broadcast %cst_4 : f32 to vector<8x32xf32>
    %27 = arith.select %25, %15, %26 : vector<8x32xi1>, vector<8x32xf32>
    %c0_5 = arith.constant 0 : index
    %c0_6 = arith.constant 0 : index
    %28 = vector.load %arg5[%c0_5, %c0_6] : memref<1x32xf32, #tpu.memory_space<vmem>>, vector<1x32xf32>
    %cst_7 = arith.constant dense<0.000000e+00> : vector<32xf32>
    %29 = vector.multi_reduction <add>, %27, %cst_7 [0] : vector<8x32xf32> to vector<32xf32>
    %30 = vector.shape_cast %29 : vector<32xf32> to vector<1x32xf32>
    %31 = arith.addf %28, %30 : vector<1x32xf32>
    %c0_8 = arith.constant 0 : index
    %c0_9 = arith.constant 0 : index
    %32 = vector.load %arg5[%c0_8, %c0_9] : memref<1x32xf32, #tpu.memory_space<vmem>>, vector<1x32xf32>
    tpu.vector_store %arg5[%c0_8, %c0_9], %31 {strides = array<i32>} : memref<1x32xf32, #tpu.memory_space<vmem>>, vector<1x32xf32>,
    %c0_i32_10 = arith.constant 0 : i32
    %33 = arith.cmpi eq, %arg1, %c0_i32_10 : i32
    %34 = arith.extui %33 : i1 to i32
    %c0_i32_11 = arith.constant 0 : i32
    %35 = arith.cmpi ne, %34, %c0_i32_11 : i32
    scf.if %35 {
      %c0_12 = arith.constant 0 : index
      %c0_13 = arith.constant 0 : index
      %36 = vector.load %arg5[%c0_12, %c0_13] : memref<1x32xf32, #tpu.memory_space<vmem>>, vector<1x32xf32>
      %37 = vector.shape_cast %36 : vector<1x32xf32> to vector<1x1x32xf32>
      %cst_14 = arith.constant dense<0.000000e+00> : vector<1xf32>
      %38 = vector.multi_reduction <add>, %37, %cst_14 [1, 2] : vector<1x1x32xf32> to vector<1xf32>
      %39 = vector.shape_cast %38 : vector<1xf32> to vector<1x1x1xf32>
      %40 = vector.extract %39[0, 0, 0] : f32 from vector<1x1x1xf32>
      %cst_15 = arith.constant 3.125000e-03 : f32
      %41 = arith.mulf %40, %cst_15 : f32
      %42 = vector.broadcast %41 : f32 to vector<1x1x1xf32>
      %c0_16 = arith.constant 0 : index
      %c0_17 = arith.constant 0 : index
      %c0_18 = arith.constant 0 : index
      %43 = vector.load %arg4[%c0_16, %c0_17, %c0_18] : memref<1x1x1xf32, #tpu.memory_space<vmem>>, vector<1x1x1xf32>
      tpu.vector_store %arg4[%c0_16, %c0_17, %c0_18], %42 {strides = array<i32>} : memref<1x1x1xf32, #tpu.memory_space<vmem>>, vector<1x1x1xf32>,
    } else {
    }
    return
  }
  func.func @transform_0(%arg0: i32, %arg1: i32) -> (i32, i32) {
    %c1_i32 = arith.constant 1 : i32
    %0 = arith.muli %arg0, %c1_i32 : i32
    %1 = arith.addi %0, %arg1 : i32
    %c1_i32_0 = arith.constant 1 : i32
    %2 = arith.minsi %1, %c1_i32_0 : i32
    %c0_i32 = arith.constant 0 : i32
    %c0_i32_1 = arith.constant 0 : i32
    return %2, %c0_i32 : i32, i32
  }
  func.func @transform_1(%arg0: i32, %arg1: i32) -> i32 {
    %c0_i32 = arith.constant 0 : i32
    %c0_i32_0 = arith.constant 0 : i32
    return %c0_i32 : i32
  }
  func.func @transform_2(%arg0: i32, %arg1: i32) -> (i32, i32, i32) {
    %c0_i32 = arith.constant 0 : i32
    %c0_i32_0 = arith.constant 0 : i32
    %c0_i32_1 = arith.constant 0 : i32
    return %arg0, %c0_i32, %c0_i32_0 : i32, i32, i32
  }
}

</mosaic_0001>

<llo_original>
// kernel: tpu_custom_call.1
$region0: #{tpu_custom_call.1}
  #allocation0 [shape = 'u32[]', space=smem, size = 0x4, offset = 0x4, fixed_abs, tag = 'smem constant byte address 0x4 - core index']
  #allocation1 [shape = 'u32[144,128]{1,0:T(1,128)}', space=vmem, size = 0x12000, scoped, tag = 'internal scratch']
  #allocation2 [shape = 'f32[1,32]{1,0:T(1,128)}', space=vmem, size = 0x200, scoped, tag = 'scratch operand']
  #allocation3 [shape = 'f32[1]{0:T(128)S(6)}', space=smem, size = 0x200, scoped, tag = 'scoped memory for tpu_custom_call.1']
  %s0 = inlined_call_operand.hbm [shape: f32[16,32], index: 0, kind: input, shape index: {}]
  %s1 = inlined_call_operand.<no memory space> [shape: f32[1], index: 1, kind: input, shape index: {}]
  %s2 = inlined_call_operand.vmem [shape: f32[2,1,1], index: 2, kind: output, shape index: {}]
  %s3 = sld [smem:[#allocation0]]
  $region53: #{tpu_custom_call.1} parent=0
    _
  %s5 = ssub.s32 1, %s3
  %s6 = scalar_select 0, %s5, %s3
  %7 = sst [smem:[#allocation3]] %s1
  $region1: #{tpu_custom_call.1} parent=0
    #allocation4 [shape = 'u8[8192]{0}', space=vmem, size = 0x2000, scoped, tag = 'input window, operand 0']
    #allocation5 [shape = 's32[2]{0}', space=sflag, size = 0x8, scoped, tag = 'scoped memory for tpu_custom_call.1']
    %8 = vsyncpa [#allocation5], 0
    %s9 = scalar_lea.sflag [#allocation5], 1
    %10 = vsyncpa %s9, 0
    loop: start=0, step=1, limit=4
    $region2: #{tpu_custom_call.1} parent=1 // loop_pre_header
      _
    $region3: #{tpu_custom_call.1} parent=1 // loop_header
      %s12 = sphi 0, %s16
      %p13 = scmp.ge.s32.totalorder %s12, 4
      %s19 = sphi 0, %s31
      %s20 = sphi 0, %s27
      %s21 = sphi 0, %s19
      %s22 = sphi 0, %s20
      %s23 = sphi 0, %s21
      %s24 = sphi 0, %s22
      %s40 = sphi 0, %s42
      %s43 = sphi 0, %s40
      %s44 = sphi 0, %s43
      %s60 = sphi 0, %s44
      %s64 = sphi 0, %s64
      %s66 = sphi 0, %s64
      %s67 = sphi 0, %s66
      %s81 = sphi 0, %s67
      %s87 = sphi 0, %s89
      %s90 = sphi 0, %s87
      %s91 = sphi 0, %s90
      %s107 = sphi 0, %s91
    $region4: #{tpu_custom_call.1} parent=1 // loop_header_branch
      %15 = sbr.rel (%p13) target = $region8
    $region5: #{tpu_custom_call.1} parent=1 // loop_body
      %s17 = ssub.s32 %s12, 1
      %s18 = ssub.s32 %s12, 2
      %s25 = sadd.s32 1, %s20
      %p26 = scmp.ge.s32.totalorder %s25, 1
      %s27 = scalar_select %p26, 0, %s25
      %s28 = sadd.s32 1, %s19
      %s29 = scalar_select %p26, %s28, %s19
      %p30 = scmp.ge.s32.totalorder %s29, 2
      %s31 = scalar_select %p30, 0, %s29
      %s32 = sadd.s32 %s19, %s20
      %p33 = scmp.lt.s32.totalorder %s32, 1
      %s34 = scalar_select %p33, %s32, 1
      %s35 = sadd.s32 %s31, %s27
      %p36 = scmp.lt.s32.totalorder %s35, 1
      %s37 = scalar_select %p36, %s35, 1
      %s38 = ssub.s32 %s34, %s37
      %p39 = scmp.eq.s32.totalorder %s38, 0
      %s41 = sadd.s32 %s40, 1
      %s42 = scalar_select %p39, %s40, %s41
      %p45 = pneg %p39
      %p46 = scmp.eq.s32.totalorder %s12, 1
      %p47 = por %p45, %p46
      %p48 = scmp.ne.s32.totalorder %s40, %s43
      %p49 = scmp.eq.s32.totalorder %s12, 0
      %p50 = por %p48, %p49
      %p51 = scmp.ne.s32.totalorder %s40, %s43
      %p52 = scmp.eq.s32.totalorder %s17, 1
      %p53 = por %p51, %p52
      %p54 = scmp.ne.s32.totalorder %s43, %s44
      %p55 = scmp.eq.s32.totalorder %s17, 0
      %p56 = por %p54, %p55
      %p57 = scmp.ne.s32.totalorder %s43, %s44
      %p58 = scmp.eq.s32.totalorder %s18, 1
      %p59 = por %p57, %p58
      %p61 = scmp.ne.s32.totalorder %s44, %s60
      %p62 = scmp.eq.s32.totalorder %s18, 0
      %p63 = por %p61, %p62
      %s65 = sadd.s32 %s64, 1
      %p68 = scmp.eq.s32.totalorder %s12, 1
      %p69 = scmp.ne.s32.totalorder %s64, %s66
      %p70 = scmp.eq.s32.totalorder %s12, 0
      %p71 = por %p69, %p70
      %p72 = scmp.ne.s32.totalorder %s64, %s66
      %p73 = scmp.eq.s32.totalorder %s17, 1
      %p74 = por %p72, %p73
      %p75 = scmp.ne.s32.totalorder %s66, %s67
      %p76 = scmp.eq.s32.totalorder %s17, 0
      %p77 = por %p75, %p76
      %p78 = scmp.ne.s32.totalorder %s66, %s67
      %p79 = scmp.eq.s32.totalorder %s18, 1
      %p80 = por %p78, %p79
      %p82 = scmp.ne.s32.totalorder %s67, %s81
      %p83 = scmp.eq.s32.totalorder %s18, 0
      %p84 = por %p82, %p83
      %s85 = ssub.s32 %s19, %s31
      %p86 = scmp.eq.s32.totalorder %s85, 0
      %s88 = sadd.s32 %s87, 1
      %s89 = scalar_select %p86, %s87, %s88
      %p92 = pneg %p86
      %p93 = scmp.eq.s32.totalorder %s12, 1
      %p94 = por %p92, %p93
      %p95 = scmp.ne.s32.totalorder %s87, %s90
      %p96 = scmp.eq.s32.totalorder %s12, 0
      %p97 = por %p95, %p96
      %p98 = scmp.ne.s32.totalorder %s87, %s90
      %p99 = scmp.eq.s32.totalorder %s17, 1
      %p100 = por %p98, %p99
      %p101 = scmp.ne.s32.totalorder %s90, %s91
      %p102 = scmp.eq.s32.totalorder %s17, 0
      %p103 = por %p101, %p102
      %p104 = scmp.ne.s32.totalorder %s90, %s91
      %p105 = scmp.eq.s32.totalorder %s18, 1
      %p106 = por %p104, %p105
      %p108 = scmp.ne.s32.totalorder %s91, %s107
      %p109 = scmp.eq.s32.totalorder %s18, 0
      %p110 = por %p108, %p109
      %p111 = scmp.le.s32.totalorder 1, %s12
      %p112 = scmp.lt.s32.totalorder %s12, 3
      %p113 = pnand %p111, %p112
      %p114 = pneg %p113
      // Predicated region
      $region9: #{tpu_custom_call.1} parent=5 // pred_check
        _
      $region10: #{tpu_custom_call.1} parent=5 // pred_check_branch
        %116 = sbr.rel (%p113) target = $region12
      $region11: #{tpu_custom_call.1} parent=5 // pred_region
        %s117 = ssub.s32 %s12, 1
        // Predicated region
        $region13: #{tpu_custom_call.1} parent=11 // pred_check
          %p118 = pneg %p77
        $region14: #{tpu_custom_call.1} parent=11 // pred_check_branch
          %120 = sbr.rel (%p118) target = $region16
        $region15: #{tpu_custom_call.1} parent=11 // pred_region
          _
        $region16: #{tpu_custom_call.1} parent=11 // pred_fallthru
          _
      $region12: #{tpu_custom_call.1} parent=5 // pred_fallthru
        _
      %p121 = scmp.lt.s32.totalorder %s12, 2
      // Predicated region
      $region17: #{tpu_custom_call.1} parent=5 // pred_check
        %p122 = pneg %p121
      $region18: #{tpu_custom_call.1} parent=5 // pred_check_branch
        %124 = sbr.rel (%p122) target = $region20
      $region19: #{tpu_custom_call.1} parent=5 // pred_region
        // Predicated region
        $region21: #{tpu_custom_call.1} parent=19 // pred_check
          %p125 = pneg %p50
        $region22: #{tpu_custom_call.1} parent=19 // pred_check_branch
          %127 = sbr.rel (%p125) target = $region24
        $region23: #{tpu_custom_call.1} parent=19 // pred_region
          %s128 = sand.u32 %s40, 1
          %s129 = scalar_lea.sflag [#allocation5], %s128
          %s130 = sand.u32 %s40, 1
          %s131 = smul.addr %s130, 8
          %s132 = scalar_lea.vmem [#allocation4], %s131
          %s133 = sadd.s32 %s19, %s20
          %p134 = scmp.lt.s32.totalorder %s133, 1
          %s135 = scalar_select %p134, %s133, 1
          %s137 = ssub.s32 128, 128
          %138 = vsyncadd %s129, %s137
          %s139 = smul.addr %s135, 128
          %s140 = scalar_lea.hbm %s0, %s139
          %s142 = sshll.u32 %s132, 4
          %s143 = int_to_ptr.vmem [resolvable:$true] %s142
          %145 = dma.hbm_to_vmem [thread:$0]  %s140, 128, %s143, %s129
        $region24: #{tpu_custom_call.1} parent=19 // pred_fallthru
          _
      $region20: #{tpu_custom_call.1} parent=5 // pred_fallthru
        _
      %p146 = scmp.le.s32.totalorder 1, %s12
      %p147 = scmp.lt.s32.totalorder %s12, 3
      %p148 = pnand %p146, %p147
      %p149 = pneg %p148
      // Predicated region
      $region25: #{tpu_custom_call.1} parent=5 // pred_check
        _
      $region26: #{tpu_custom_call.1} parent=5 // pred_check_branch
        %151 = sbr.rel (%p148) target = $region28
      $region27: #{tpu_custom_call.1} parent=5 // pred_region
        %s152 = ssub.s32 %s12, 1
        %s153 = sand.u32 %s43, 1
        %s154 = scalar_lea.sflag [#allocation5], %s153
        %s155 = sand.u32 %s43, 1
        %s156 = smul.addr %s155, 8
        %s157 = scalar_lea.vmem [#allocation4], %s156
        // Predicated region
        $region29: #{tpu_custom_call.1} parent=27 // pred_check
          %p158 = pneg %p56
        $region30: #{tpu_custom_call.1} parent=27 // pred_check_branch
          %160 = sbr.rel (%p158) target = $region32
        $region31: #{tpu_custom_call.1} parent=27 // pred_region
          %161 = dma.done %s154, 128
        $region32: #{tpu_custom_call.1} parent=27 // pred_fallthru
          _
        %s162 = sand.u32 %s43, 1
        %s163 = scalar_lea.sflag [#allocation5], %s162
        %s164 = sand.u32 %s43, 1
        %s165 = smul.addr %s164, 8
        %s166 = scalar_lea.vmem [#allocation4], %s165
        %p167 = pneg %p56
        %p168 = pneg %p53
        %p169 = pneg %p77
        %p170 = pneg %p74
        %p171 = pneg %p103
        %p172 = pneg %p100
        %p173 = scmp.lt.s32.totalorder %s21, 1
        %s174 = scalar_select %p173, %s21, 1
        %s175 = scalar_lea.vmem %s2, %s174
        %s176 = sadd.s32 %s21, %s22
        %p177 = scmp.lt.s32.totalorder %s176, 1
        %s178 = scalar_select %p177, %s176, 1
        %p179 = scmp.lt.s32.totalorder %s21, 1
        %s180 = scalar_select %p179, %s21, 1
        %s181 = scalar_lea.vmem %s2, %s180
        %p182 = scmp.eq.s32.totalorder %s22, 0
        // Predicated region
        $region33: #{tpu_custom_call.1} parent=27 // pred_check
          %p183 = pneg %p182
        $region34: #{tpu_custom_call.1} parent=27 // pred_check_branch
          %185 = sbr.rel (%p183) target = $region36
        $region35: #{tpu_custom_call.1} parent=27 // pred_region
          %vm186 = vcmask 253952
          %187 = vst.msk [vmem:[#allocation2] sm:$0x1] %vm186, 0.0
        $region36: #{tpu_custom_call.1} parent=27 // pred_fallthru
          _
        %v188 = vld [vmem:[%s157] sm:$0xff]
        %v189 = vmul.f32 %v188, %v188
        %vm190 = vcmask 261120
        %v191 = vsel %vm190, %v189, 0.0
        %192 = vadd.xlane.f32.xlu0 %v191
        %v193 = vpop.xlane.xlu0 %192
        %v194 = vrsqrt.pop %v193
        %v195 = vmin.f32 %v194, 1e+12
        %v196 = vmul.f32 %v188, %v195
        %s197 = sld [smem:[#allocation3]]
        %v198 = vstv %s197
        %v199 = vsub.f32 %v196, %v198
        %v200 = vmul.f32 %v199, %v199
        %s201 = sadd.s32 %s21, %s22
        %s202 = smul.u32 %s201, 8
        %v203 = vlaneseq
        %v204 = vshrl.u32 %v203, 7
        %v205 = vstv %s202
        %v206 = vadd.s32 %v205, %v204
        %vm207 = vcmp.lt.s32.totalorder %v206, 16
        %v208 = vsel %vm207, 1, 0
        %vm209 = vcmp.eq.s32.totalorder %v208, 1
        %v210 = vsel %vm209, %v200, 0.0
        %v211 = vld [vmem:[#allocation2] sm:$0x1]
        %v212 = vsel %vm190, %v210, 0.0
        %v213 = vrot.slane %v212, 4
        %v214 = vadd.f32 %v212, %v213
        %v215 = vrot.slane %v214, 2
        %v216 = vadd.f32 %v214, %v215
        %v217 = vrot.slane %v216, 1
        %v218 = vadd.f32 %v216, %v217
        %v219 = vadd.f32 %v211, %v218
        %vm220 = vcmask 253952
        %221 = vst.msk [vmem:[#allocation2] sm:$0x1] %vm220, %v219
        // Predicated region
        $region37: #{tpu_custom_call.1} parent=27 // pred_check
          %p222 = pneg %p182
        $region38: #{tpu_custom_call.1} parent=27 // pred_check_branch
          %224 = sbr.rel (%p222) target = $region40
        $region39: #{tpu_custom_call.1} parent=27 // pred_region
          %v225 = vld [vmem:[#allocation2] sm:$0x1]
          %v226 = vsel %vm220, %v225, 0.0
          %227 = vadd.xlane.f32.xlu0 %v226
          %v228 = vpop.xlane.xlu0 %227
          %v229 = vrot.slane %v228, 4
          %v230 = vadd.f32 %v228, %v229
          %v231 = vrot.slane %v230, 2
          %v232 = vadd.f32 %v230, %v231
          %v233 = vrot.slane %v232, 1
          %v234 = vadd.f32 %v232, %v233
          %s235 = vtos %v234
          %s236 = smul.f32 %s235, 0.003125
          %v237 = vstv %s236
          %vm238 = vcmask 0
          %239 = vst.msk [vmem:[%s181] sm:$0x1] %vm238, %v237
        $region40: #{tpu_custom_call.1} parent=27 // pred_fallthru
          _
        %p240 = scmp.lt.s32.totalorder %s21, 1
        %s241 = scalar_select %p240, %s21, 1
        %s242 = scalar_lea.vmem %s2, %s241
        // Predicated region
        $region41: #{tpu_custom_call.1} parent=27 // pred_check
          %p243 = pneg %p100
        $region42: #{tpu_custom_call.1} parent=27 // pred_check_branch
          %245 = sbr.rel (%p243) target = $region44
        $region43: #{tpu_custom_call.1} parent=27 // pred_region
          _
        $region44: #{tpu_custom_call.1} parent=27 // pred_fallthru
          _
      $region28: #{tpu_custom_call.1} parent=5 // pred_fallthru
        _
      %p246 = scmp.le.s32.totalorder 2, %s12
      // Predicated region
      $region45: #{tpu_custom_call.1} parent=5 // pred_check
        %p247 = pneg %p246
      $region46: #{tpu_custom_call.1} parent=5 // pred_check_branch
        %249 = sbr.rel (%p247) target = $region48
      $region47: #{tpu_custom_call.1} parent=5 // pred_region
        %s250 = ssub.s32 %s12, 2
        // Predicated region
        $region49: #{tpu_custom_call.1} parent=47 // pred_check
          %p251 = pneg %p106
        $region50: #{tpu_custom_call.1} parent=47 // pred_check_branch
          %253 = sbr.rel (%p251) target = $region52
        $region51: #{tpu_custom_call.1} parent=47 // pred_region
          %p254 = scmp.lt.s32.totalorder %s23, 1
          %s255 = scalar_select %p254, %s23, 1
          %s256 = scalar_lea.vmem %s2, %s255
        $region52: #{tpu_custom_call.1} parent=47 // pred_fallthru
          _
      $region48: #{tpu_custom_call.1} parent=5 // pred_fallthru
        _
    $region6: #{tpu_custom_call.1} parent=1 // loop_footer
      %s16 = sadd.s32 1, %s12
    $region7: #{tpu_custom_call.1} parent=1 // loop_footer_branch
      %11 = sbr.rel target = $region3
    $region8: #{tpu_custom_call.1} parent=1 // loop_exit
      _
    %257 = vsyncpa [#allocation5], 1
    %s258 = scalar_lea.sflag [#allocation5], 1
    %259 = vsyncpa %s258, 1

</llo_original>
